<compile_context>
chip_gen: v5e
topology: v5e:2x2
jax: 0.10.0
libtpu: 0.0.40
codegen_flags: <defaults>
</compile_context>

<pallas_src>
import functools

import jax
import jax.numpy as jnp
from jax import lax
from jax.experimental import pallas as pl
from jax.experimental.pallas import tpu as pltpu


def _round_up(x: int, m: int) -> int:
    return ((x + m - 1) // m) * m


def deepsets_pooled_kernel(ids_ref, emb_ref, w1t_ref, b1_ref, out_ref, *, set_len):
    """One grid step over `block_n` sets (rows = block_n * set_len elements).

    ids_ref : [rows, 1]      int32  digit ids of this batch tile
    emb_ref : [V_pad, E_pad] bf16   embedding table (VMEM resident across steps)
    w1t_ref : [E_pad, H_pad] bf16   fc1 weight, pre-transposed
    b1_ref  : [1, H_pad]     f32    fc1 bias
    out_ref : [block_n, H_pad] f32  sum-pooled hidden features (lane-dense store)
    """
    rows = ids_ref.shape[0]
    v_pad = emb_ref.shape[0]
    h_pad = out_ref.shape[1]
    block_n = out_ref.shape[0]

    # Exact one-hot of the ids (VPU compare), consumed by the MXU as the embedding
    # lookup. The ids block is a narrow int32 column (tiny: rows*4B) because the
    # compare needs row-indexed ids; the big tensors below are all lane-dense.
    ids = ids_ref[...]                                                     # [rows, 1]
    onehot = (lax.broadcasted_iota(jnp.int32, (rows, v_pad), 1)
              == ids).astype(jnp.bfloat16)                                 # [rows, V_pad]

    # Embedding lookup + FC1 on the MXU, f32 accumulation; tanh on the EUP in f32.
    e = jnp.dot(onehot, emb_ref[...],
                preferred_element_type=jnp.float32)                        # [rows, E_pad]
    pre = jnp.dot(e.astype(jnp.bfloat16), w1t_ref[...],
                  preferred_element_type=jnp.float32) + b1_ref[...]        # [rows, H_pad]
    h = jnp.tanh(pre)                                                      # [rows, H_pad]

    # Sum pooling over the set dimension: leading-dim reshape is layout-free
    # because set_len % 8 == 0 (sublane tile), then reduce over axis=1.
    pooled = jnp.sum(h.reshape(block_n, set_len, h_pad), axis=1)           # [block_n, H_pad]
    out_ref[...] = pooled


def deepsets_forward(x, emb, w1_t, b1, w2, b2, *, block_n=None):
    """DeepSets forward.

    x: [N, L] int32 ids; emb: [V, E]; w1_t: [E, H] (fc1 weight transposed);
    b1: [H]; w2: [1, H] (fc2 weight); b2: [1].  Returns [N] f32 (matches .squeeze()).
    """
    N, L = x.shape
    V, E = emb.shape
    H = w1_t.shape[1]
    if L % 8 != 0:
        # General L would need padded positions masked out before pooling.
        raise ValueError("set length L must be a multiple of 8 for layout-free pooling")

    LANE = 128
    E_pad, H_pad = _round_up(E, LANE), _round_up(H, LANE)
    V_pad = _round_up(V, LANE)            # digit vocab -> one MXU tile on the contraction

    if block_n is None:
        block_n = max(1, 256 // L)        # ~256 rows per grid step
    block_n = max(8, _round_up(block_n, 8))   # out block sublane dim must be 8-aligned
    N_pad = _round_up(N, block_n)
    num_tiles = N_pad // block_n
    rows = block_n * L

    # Zero-padded, dtype-prepared parameters (done once in the wrapper).
    emb_p = jnp.zeros((V_pad, E_pad), jnp.bfloat16).at[:V, :E].set(emb.astype(jnp.bfloat16))
    w1t_p = jnp.zeros((E_pad, H_pad), jnp.bfloat16).at[:E, :H].set(w1_t.astype(jnp.bfloat16))
    b1_p = jnp.zeros((1, H_pad), jnp.float32).at[0, :H].set(b1.astype(jnp.float32))

    ids = jnp.zeros((N_pad, L), jnp.int32).at[:N].set(x.astype(jnp.int32))
    ids = ids.reshape(N_pad * L, 1)

    kernel = functools.partial(deepsets_pooled_kernel, set_len=L)
    pooled = pl.pallas_call(
        kernel,
        out_shape=jax.ShapeDtypeStruct((N_pad, H_pad), jnp.float32),
        grid=(num_tiles,),
        in_specs=[
            pl.BlockSpec((rows, 1), lambda i: (i, 0)),        # ids: streamed per tile
            pl.BlockSpec((V_pad, E_pad), lambda i: (0, 0)),   # weights: VMEM resident
            pl.BlockSpec((E_pad, H_pad), lambda i: (0, 0)),
            pl.BlockSpec((1, H_pad), lambda i: (0, 0)),
        ],
        out_specs=pl.BlockSpec((block_n, H_pad), lambda i: (i, 0)),
        compiler_params=pltpu.CompilerParams(
            dimension_semantics=("parallel",)),               # shard batch tiles (v7x TCs)
    )(ids, emb_p, w1t_p, b1_p)

    # FC2 (H -> 1) + squeeze: trivial, done in the wrapper so kernel stores remain
    # lane-dense [block_n, 128] instead of masked [*, 1] partial stores.
    pooled = pooled[:N, :H]
    out = pooled @ w2.T.astype(jnp.float32) + b2.astype(jnp.float32)       # [N, 1]
    return out[:, 0]                                                       # [N]


def deepsets_reference(x, emb, w1_t, b1, w2, b2):
    e = emb[x]                                   # [N, L, E]
    h = jnp.tanh(e @ w1_t + b1)                  # [N, L, H]
    pooled = h.sum(axis=1)                       # [N, H]
    return (pooled @ w2.T + b2)[:, 0]            # [N]


if __name__ == "__main__":
    # Digit-set config consistent with the PyTorch module: N sets of L digits,
    # vocab V=10, embedding_dim=hidden_dim=32.  block_n=8 -> grid of 2 tiles.
    N, L, V, E, H = 16, 8, 10, 32, 32
    key = jax.random.PRNGKey(0)
    kx, ke, kw1, kb1, kw2, kb2 = jax.random.split(key, 6)

    x = jax.random.randint(kx, (N, L), 0, V, dtype=jnp.int32)
    emb = jax.random.normal(ke, (V, E), dtype=jnp.float32)
    w1_t = 0.1 * jax.random.normal(kw1, (E, H), dtype=jnp.float32)   # fc1 weight, transposed
    b1 = 0.1 * jax.random.normal(kb1, (H,), dtype=jnp.float32)
    w2 = 0.1 * jax.random.normal(kw2, (1, H), dtype=jnp.float32)     # fc2 weight [1, H]
    b2 = 0.1 * jax.random.normal(kb2, (1,), dtype=jnp.float32)

    out = jax.block_until_ready(deepsets_forward(x, emb, w1_t, b1, w2, b2, block_n=8))
    ref = deepsets_reference(x, emb, w1_t, b1, w2, b2)
    assert out.shape == (N,)
    # bf16 matmul operands with f32 accumulation -> compare with a modest tolerance.
    assert jnp.allclose(out, ref, atol=5e-2, rtol=5e-2), (out, ref)
    print("KERNEL_OK")
</pallas_src>

<mosaic_0001>
module attributes {stable_mosaic.version = 11 : i64} {
  func.func @deepsets_pooled_kernel(%arg0: i32, %arg1: memref<64x1xi32, #tpu.memory_space<vmem>>, %arg2: memref<128x128xbf16, #tpu.memory_space<vmem>>, %arg3: memref<128x128xbf16, #tpu.memory_space<vmem>>, %arg4: memref<1x128xf32, #tpu.memory_space<vmem>>, %arg5: memref<8x128xf32, #tpu.memory_space<vmem>>) attributes {dimension_semantics = [#tpu.dimension_semantics<parallel>], iteration_bounds = array<i64: 2>, scalar_prefetch = 0 : i64, scratch_operands = 0 : i64, tpu.core_type = #tpu.core_type<tc>, window_params = [{transform_indices = @transform_0, window_bounds = array<i64: 64, 1>}, {pipeline_mode = #tpu.pipeline_mode<synchronous>, transform_indices = @transform_1, window_bounds = array<i64: 128, 128>}, {pipeline_mode = #tpu.pipeline_mode<synchronous>, transform_indices = @transform_2, window_bounds = array<i64: 128, 128>}, {pipeline_mode = #tpu.pipeline_mode<synchronous>, transform_indices = @transform_3, window_bounds = array<i64: 1, 128>}, {transform_indices = @transform_4, window_bounds = array<i64: 8, 128>}]} {
    %c0 = arith.constant 0 : index
    %c0_0 = arith.constant 0 : index
    %0 = vector.load %arg1[%c0, %c0_0] : memref<64x1xi32, #tpu.memory_space<vmem>>, vector<64x1xi32>
    %1 = tpu.iota {dimensions = array<i32: 1>} : vector<64x128xi32>
    %2 = vector.broadcast %0 : vector<64x1xi32> to vector<64x128xi32>
    %3 = arith.cmpi eq, %1, %2 : vector<64x128xi32>
    %4 = arith.extui %3 : vector<64x128xi1> to vector<64x128xi32>
    %5 = arith.sitofp %4 : vector<64x128xi32> to vector<64x128xf32>
    %6 = arith.truncf %5 : vector<64x128xf32> to vector<64x128xbf16>
    %c0_1 = arith.constant 0 : index
    %c0_2 = arith.constant 0 : index
    %7 = vector.load %arg2[%c0_1, %c0_2] : memref<128x128xbf16, #tpu.memory_space<vmem>>, vector<128x128xbf16>
    %cst = arith.constant dense<0.000000e+00> : vector<64x128xf32>
    %8 = tpu.matmul %6, %7, %cst {dimension_numbers = #tpu.dot_dimension_numbers<[1], [0], [0], [1], [0, 0, 1, 1], [], []>} : vector<64x128xbf16>, vector<128x128xbf16>, vector<64x128xf32> -> vector<64x128xf32>
    %9 = arith.truncf %8 : vector<64x128xf32> to vector<64x128xbf16>
    %c0_3 = arith.constant 0 : index
    %c0_4 = arith.constant 0 : index
    %10 = vector.load %arg3[%c0_3, %c0_4] : memref<128x128xbf16, #tpu.memory_space<vmem>>, vector<128x128xbf16>
    %cst_5 = arith.constant dense<0.000000e+00> : vector<64x128xf32>
    %11 = tpu.matmul %9, %10, %cst_5 {dimension_numbers = #tpu.dot_dimension_numbers<[1], [0], [0], [1], [0, 0, 1, 1], [], []>} : vector<64x128xbf16>, vector<128x128xbf16>, vector<64x128xf32> -> vector<64x128xf32>
    %c0_6 = arith.constant 0 : index
    %c0_7 = arith.constant 0 : index
    %12 = vector.load %arg4[%c0_6, %c0_7] : memref<1x128xf32, #tpu.memory_space<vmem>>, vector<1x128xf32>
    %13 = vector.broadcast %12 : vector<1x128xf32> to vector<64x128xf32>
    %14 = arith.addf %11, %13 : vector<64x128xf32>
    %15 = math.tanh %14 : vector<64x128xf32>
    %16 = vector.shape_cast %15 : vector<64x128xf32> to vector<8x8x128xf32>
    %cst_8 = arith.constant dense<0.000000e+00> : vector<8x128xf32>
    %17 = vector.multi_reduction <add>, %16, %cst_8 [1] : vector<8x8x128xf32> to vector<8x128xf32>
    %c0_9 = arith.constant 0 : index
    %c0_10 = arith.constant 0 : index
    %18 = vector.load %arg5[%c0_9, %c0_10] : memref<8x128xf32, #tpu.memory_space<vmem>>, vector<8x128xf32>
    tpu.vector_store %arg5[%c0_9, %c0_10], %17 {strides = array<i32>} : memref<8x128xf32, #tpu.memory_space<vmem>>, vector<8x128xf32>,
    return
  }
  func.func @transform_0(%arg0: i32) -> (i32, i32) {
    %c0_i32 = arith.constant 0 : i32
    %c0_i32_0 = arith.constant 0 : i32
    return %arg0, %c0_i32 : i32, i32
  }
  func.func @transform_1(%arg0: i32) -> (i32, i32) {
    %c0_i32 = arith.constant 0 : i32
    %c0_i32_0 = arith.constant 0 : i32
    %c0_i32_1 = arith.constant 0 : i32
    return %c0_i32, %c0_i32_0 : i32, i32
  }
  func.func @transform_2(%arg0: i32) -> (i32, i32) {
    %c0_i32 = arith.constant 0 : i32
    %c0_i32_0 = arith.constant 0 : i32
    %c0_i32_1 = arith.constant 0 : i32
    return %c0_i32, %c0_i32_0 : i32, i32
  }
  func.func @transform_3(%arg0: i32) -> (i32, i32) {
    %c0_i32 = arith.constant 0 : i32
    %c0_i32_0 = arith.constant 0 : i32
    %c0_i32_1 = arith.constant 0 : i32
    return %c0_i32, %c0_i32_0 : i32, i32
  }
  func.func @transform_4(%arg0: i32) -> (i32, i32) {
    %c0_i32 = arith.constant 0 : i32
    %c0_i32_0 = arith.constant 0 : i32
    return %arg0, %c0_i32 : i32, i32
  }
}

</mosaic_0001>

<llo_original>
// kernel: tpu_custom_call.1
$region0: #{tpu_custom_call.1}
  #allocation0 [shape = 'u32[]', space=smem, size = 0x4, offset = 0x4, fixed_abs, tag = 'smem constant byte address 0x4 - core index']
  #allocation1 [shape = 'u32[72,128]{1,0:T(1,128)}', space=vmem, size = 0x9000, scoped, tag = 'internal scratch']
  %s0 = inlined_call_operand.vmem [shape: s32[128,1], index: 0, kind: input, shape index: {}]
  %s1 = inlined_call_operand.vmem [shape: bf16[128,128], index: 1, kind: input, shape index: {}]
  %s2 = inlined_call_operand.vmem [shape: bf16[128,128], index: 2, kind: input, shape index: {}]
  %s3 = inlined_call_operand.vmem [shape: f32[1,128], index: 3, kind: input, shape index: {}]
  %s4 = inlined_call_operand.hbm [shape: f32[16,128], index: 4, kind: output, shape index: {}]
  %s5 = sld [smem:[#allocation0]]
  $region49: #{tpu_custom_call.1} parent=0
    _
  %s7 = ssub.s32 1, %s5
  %s8 = scalar_select 0, %s7, %s5
  $region1: #{tpu_custom_call.1} parent=0
    #allocation2 [shape = 'u8[8192]{0}', space=vmem, size = 0x2000, scoped, tag = 'output window, operand 0']
    #allocation3 [shape = 's32[2]{0}', space=sflag, size = 0x8, scoped, tag = 'scoped memory for tpu_custom_call.1']
    %9 = vsyncpa [#allocation3], 0
    %s10 = scalar_lea.sflag [#allocation3], 1
    %11 = vsyncpa %s10, 0
    loop: start=0, step=1, limit=4
    $region2: #{tpu_custom_call.1} parent=1 // loop_pre_header
      _
    $region3: #{tpu_custom_call.1} parent=1 // loop_header
      %s13 = sphi 0, %s17
      %p14 = scmp.ge.s32.totalorder %s13, 4
      %s23 = sphi 0, %s25
      %s26 = sphi 0, %s23
      %s27 = sphi 0, %s26
      %s43 = sphi 0, %s27
      %s47 = sphi 0, %s47
      %s49 = sphi 0, %s47
      %s50 = sphi 0, %s49
      %s64 = sphi 0, %s50
      %s68 = sphi 0, %s68
      %s70 = sphi 0, %s68
      %s71 = sphi 0, %s70
      %s85 = sphi 0, %s71
      %s89 = sphi 0, %s89
      %s91 = sphi 0, %s89
      %s92 = sphi 0, %s91
      %s106 = sphi 0, %s92
      %s112 = sphi 0, %s114
      %s115 = sphi 0, %s112
      %s116 = sphi 0, %s115
      %s132 = sphi 0, %s116
    $region4: #{tpu_custom_call.1} parent=1 // loop_header_branch
      %16 = sbr.rel (%p14) target = $region8
    $region5: #{tpu_custom_call.1} parent=1 // loop_body
      %s18 = ssub.s32 %s13, 1
      %s19 = ssub.s32 %s13, 2
      %s20 = sadd.s32 %s13, 1
      %s21 = ssub.s32 %s13, %s20
      %p22 = scmp.eq.s32.totalorder %s21, 0
      %s24 = sadd.s32 %s23, 1
      %s25 = scalar_select %p22, %s23, %s24
      %p28 = pneg %p22
      %p29 = scmp.eq.s32.totalorder %s13, 1
      %p30 = por %p28, %p29
      %p31 = scmp.ne.s32.totalorder %s23, %s26
      %p32 = scmp.eq.s32.totalorder %s13, 0
      %p33 = por %p31, %p32
      %p34 = scmp.ne.s32.totalorder %s23, %s26
      %p35 = scmp.eq.s32.totalorder %s18, 1
      %p36 = por %p34, %p35
      %p37 = scmp.ne.s32.totalorder %s26, %s27
      %p38 = scmp.eq.s32.totalorder %s18, 0
      %p39 = por %p37, %p38
      %p40 = scmp.ne.s32.totalorder %s26, %s27
      %p41 = scmp.eq.s32.totalorder %s19, 1
      %p42 = por %p40, %p41
      %p44 = scmp.ne.s32.totalorder %s27, %s43
      %p45 = scmp.eq.s32.totalorder %s19, 0
      %p46 = por %p44, %p45
      %s48 = sadd.s32 %s47, 1
      %p51 = scmp.eq.s32.totalorder %s13, 1
      %p52 = scmp.ne.s32.totalorder %s47, %s49
      %p53 = scmp.eq.s32.totalorder %s13, 0
      %p54 = por %p52, %p53
      %p55 = scmp.ne.s32.totalorder %s47, %s49
      %p56 = scmp.eq.s32.totalorder %s18, 1
      %p57 = por %p55, %p56
      %p58 = scmp.ne.s32.totalorder %s49, %s50
      %p59 = scmp.eq.s32.totalorder %s18, 0
      %p60 = por %p58, %p59
      %p61 = scmp.ne.s32.totalorder %s49, %s50
      %p62 = scmp.eq.s32.totalorder %s19, 1
      %p63 = por %p61, %p62
      %p65 = scmp.ne.s32.totalorder %s50, %s64
      %p66 = scmp.eq.s32.totalorder %s19, 0
      %p67 = por %p65, %p66
      %s69 = sadd.s32 %s68, 1
      %p72 = scmp.eq.s32.totalorder %s13, 1
      %p73 = scmp.ne.s32.totalorder %s68, %s70
      %p74 = scmp.eq.s32.totalorder %s13, 0
      %p75 = por %p73, %p74
      %p76 = scmp.ne.s32.totalorder %s68, %s70
      %p77 = scmp.eq.s32.totalorder %s18, 1
      %p78 = por %p76, %p77
      %p79 = scmp.ne.s32.totalorder %s70, %s71
      %p80 = scmp.eq.s32.totalorder %s18, 0
      %p81 = por %p79, %p80
      %p82 = scmp.ne.s32.totalorder %s70, %s71
      %p83 = scmp.eq.s32.totalorder %s19, 1
      %p84 = por %p82, %p83
      %p86 = scmp.ne.s32.totalorder %s71, %s85
      %p87 = scmp.eq.s32.totalorder %s19, 0
      %p88 = por %p86, %p87
      %s90 = sadd.s32 %s89, 1
      %p93 = scmp.eq.s32.totalorder %s13, 1
      %p94 = scmp.ne.s32.totalorder %s89, %s91
      %p95 = scmp.eq.s32.totalorder %s13, 0
      %p96 = por %p94, %p95
      %p97 = scmp.ne.s32.totalorder %s89, %s91
      %p98 = scmp.eq.s32.totalorder %s18, 1
      %p99 = por %p97, %p98
      %p100 = scmp.ne.s32.totalorder %s91, %s92
      %p101 = scmp.eq.s32.totalorder %s18, 0
      %p102 = por %p100, %p101
      %p103 = scmp.ne.s32.totalorder %s91, %s92
      %p104 = scmp.eq.s32.totalorder %s19, 1
      %p105 = por %p103, %p104
      %p107 = scmp.ne.s32.totalorder %s92, %s106
      %p108 = scmp.eq.s32.totalorder %s19, 0
      %p109 = por %p107, %p108
      %s110 = ssub.s32 %s13, %s20
      %p111 = scmp.eq.s32.totalorder %s110, 0
      %s113 = sadd.s32 %s112, 1
      %s114 = scalar_select %p111, %s112, %s113
      %p117 = pneg %p111
      %p118 = scmp.eq.s32.totalorder %s13, 1
      %p119 = por %p117, %p118
      %p120 = scmp.ne.s32.totalorder %s112, %s115
      %p121 = scmp.eq.s32.totalorder %s13, 0
      %p122 = por %p120, %p121
      %p123 = scmp.ne.s32.totalorder %s112, %s115
      %p124 = scmp.eq.s32.totalorder %s18, 1
      %p125 = por %p123, %p124
      %p126 = scmp.ne.s32.totalorder %s115, %s116
      %p127 = scmp.eq.s32.totalorder %s18, 0
      %p128 = por %p126, %p127
      %p129 = scmp.ne.s32.totalorder %s115, %s116
      %p130 = scmp.eq.s32.totalorder %s19, 1
      %p131 = por %p129, %p130
      %p133 = scmp.ne.s32.totalorder %s116, %s132
      %p134 = scmp.eq.s32.totalorder %s19, 0
      %p135 = por %p133, %p134
      %p136 = scmp.le.s32.totalorder 1, %s13
      %p137 = scmp.lt.s32.totalorder %s13, 3
      %p138 = pnand %p136, %p137
      %p139 = pneg %p138
      // Predicated region
      $region9: #{tpu_custom_call.1} parent=5 // pred_check
        _
      $region10: #{tpu_custom_call.1} parent=5 // pred_check_branch
        %141 = sbr.rel (%p138) target = $region12
      $region11: #{tpu_custom_call.1} parent=5 // pred_region
        %s142 = ssub.s32 %s13, 1
        // Predicated region
        $region13: #{tpu_custom_call.1} parent=11 // pred_check
          %p143 = pneg %p60
        $region14: #{tpu_custom_call.1} parent=11 // pred_check_branch
          %145 = sbr.rel (%p143) target = $region16
        $region15: #{tpu_custom_call.1} parent=11 // pred_region
          _
        $region16: #{tpu_custom_call.1} parent=11 // pred_fallthru
          _
        // Predicated region
        $region17: #{tpu_custom_call.1} parent=11 // pred_check
          %p146 = pneg %p81
        $region18: #{tpu_custom_call.1} parent=11 // pred_check_branch
          %148 = sbr.rel (%p146) target = $region20
        $region19: #{tpu_custom_call.1} parent=11 // pred_region
          _
        $region20: #{tpu_custom_call.1} parent=11 // pred_fallthru
          _
        // Predicated region
        $region21: #{tpu_custom_call.1} parent=11 // pred_check
          %p149 = pneg %p102
        $region22: #{tpu_custom_call.1} parent=11 // pred_check_branch
          %151 = sbr.rel (%p149) target = $region24
        $region23: #{tpu_custom_call.1} parent=11 // pred_region
          _
        $region24: #{tpu_custom_call.1} parent=11 // pred_fallthru
          _
      $region12: #{tpu_custom_call.1} parent=5 // pred_fallthru
        _
      %p152 = scmp.lt.s32.totalorder %s13, 2
      // Predicated region
      $region25: #{tpu_custom_call.1} parent=5 // pred_check
        %p153 = pneg %p152
      $region26: #{tpu_custom_call.1} parent=5 // pred_check_branch
        %155 = sbr.rel (%p153) target = $region28
      $region27: #{tpu_custom_call.1} parent=5 // pred_region
        // Predicated region
        $region29: #{tpu_custom_call.1} parent=27 // pred_check
          %p156 = pneg %p33
        $region30: #{tpu_custom_call.1} parent=27 // pred_check_branch
          %158 = sbr.rel (%p156) target = $region32
        $region31: #{tpu_custom_call.1} parent=27 // pred_region
          %s159 = smul.u32 8, %s13
          %p160 = scmp.lt.s32.totalorder %s159, 15
          %s161 = scalar_select %p160, %s159, 15
          %s162 = smul.addr %s161, 8
          %s163 = scalar_lea.vmem %s0, %s162
          %s164 = smul.u32 8, %s13
        $region32: #{tpu_custom_call.1} parent=27 // pred_fallthru
          _
      $region28: #{tpu_custom_call.1} parent=5 // pred_fallthru
        _
      %p165 = scmp.le.s32.totalorder 1, %s13
      %p166 = scmp.lt.s32.totalorder %s13, 3
      %p167 = pnand %p165, %p166
      %p168 = pneg %p167
      // Predicated region
      $region33: #{tpu_custom_call.1} parent=5 // pred_check
        _
      $region34: #{tpu_custom_call.1} parent=5 // pred_check_branch
        %170 = sbr.rel (%p167) target = $region36
      $region35: #{tpu_custom_call.1} parent=5 // pred_region
        %s171 = ssub.s32 %s13, 1
        %s172 = smul.u32 8, %s18
        %p173 = scmp.lt.s32.totalorder %s172, 15
        %s174 = scalar_select %p173, %s172, 15
        %s175 = smul.addr %s174, 8
        %s176 = scalar_lea.vmem %s0, %s175
        %p177 = pneg %p39
        %p178 = pneg %p36
        %p179 = pneg %p60
        %p180 = pneg %p57
        %p181 = pneg %p81
        %p182 = pneg %p78
        %p183 = pneg %p102
        %p184 = pneg %p99
        %p185 = pneg %p128
        %p186 = pneg %p125
        %s187 = sand.u32 %s115, 1
        %s188 = scalar_lea.sflag [#allocation3], %s187
        %s189 = sand.u32 %s115, 1
        %s190 = smul.addr %s189, 8
        %s191 = scalar_lea.vmem [#allocation2], %s190
        %s192 = smul.u32 8, %s18
        %p193 = scmp.lt.s32.totalorder %s192, 15
        %s194 = scalar_select %p193, %s192, 15
        %s195 = smul.addr %s194, 8
        %s196 = scalar_lea.vmem %s0, %s195
        %s197 = smul.u32 8, %s18
        %v198 = vld [vmem:[%s196] sm:$0xff]
        %v199 = vld [vmem:[%s196 + $0x8] sm:$0xff]
        %v200 = vld [vmem:[%s196 + $0x10] sm:$0xff]
        %v201 = vld [vmem:[%s196 + $0x18] sm:$0xff]
        %v202 = vld [vmem:[%s196 + $0x20] sm:$0xff]
        %v203 = vld [vmem:[%s196 + $0x28] sm:$0xff]
        %v204 = vld [vmem:[%s196 + $0x30] sm:$0xff]
        %v205 = vld [vmem:[%s196 + $0x38] sm:$0xff]
        %v206 = vlaneseq
        %v207 = vand.u32 %v206, 127
        %208 = vset.pattern.permute.xlu0 0
        %209 = vperm.xlu0 %208, %v198
        %v210 = vpop.permute.xlu0 %209
        %211 = vset.pattern.permute.xlu0 0
        %212 = vperm.xlu0 %211, %v199
        %v213 = vpop.permute.xlu0 %212
        %214 = vset.pattern.permute.xlu0 0
        %215 = vperm.xlu0 %214, %v200
        %v216 = vpop.permute.xlu0 %215
        %217 = vset.pattern.permute.xlu0 0
        %218 = vperm.xlu0 %217, %v201
        %v219 = vpop.permute.xlu0 %218
        %220 = vset.pattern.permute.xlu0 0
        %221 = vperm.xlu0 %220, %v202
        %v222 = vpop.permute.xlu0 %221
        %223 = vset.pattern.permute.xlu0 0
        %224 = vperm.xlu0 %223, %v203
        %v225 = vpop.permute.xlu0 %224
        %226 = vset.pattern.permute.xlu0 0
        %227 = vperm.xlu0 %226, %v204
        %v228 = vpop.permute.xlu0 %227
        %229 = vset.pattern.permute.xlu0 0
        %230 = vperm.xlu0 %229, %v205
        %v231 = vpop.permute.xlu0 %230
        %vm232 = vcmp.eq.s32.totalorder %v207, %v210
        %vm233 = vcmp.eq.s32.totalorder %v207, %v213
        %vm234 = vcmp.eq.s32.totalorder %v207, %v216
        %vm235 = vcmp.eq.s32.totalorder %v207, %v219
        %vm236 = vcmp.eq.s32.totalorder %v207, %v222
        %vm237 = vcmp.eq.s32.totalorder %v207, %v225
        %vm238 = vcmp.eq.s32.totalorder %v207, %v228
        %vm239 = vcmp.eq.s32.totalorder %v207, %v231
        %v240 = vsel %vm232, 1, 0
        %v241 = vsel %vm233, 1, 0
        %v242 = vsel %vm234, 1, 0
        %v243 = vsel %vm235, 1, 0
        %v244 = vsel %vm236, 1, 0
        %v245 = vsel %vm237, 1, 0
        %v246 = vsel %vm238, 1, 0
        %v247 = vsel %vm239, 1, 0
        %v248 = vcvt.s32.f32 %v240
        %v249 = vcvt.s32.f32 %v241
        %v250 = vcvt.s32.f32 %v242
        %v251 = vcvt.s32.f32 %v243
        %v252 = vcvt.s32.f32 %v244
        %v253 = vcvt.s32.f32 %v245
        %v254 = vcvt.s32.f32 %v246
        %v255 = vcvt.s32.f32 %v247
        %v256 = vpack.c.bf16 %v249, %v248
        %v257 = vpack.c.bf16 %v251, %v250
        %v258 = vpack.c.bf16 %v253, %v252
        %v259 = vpack.c.bf16 %v255, %v254
        %v260 = vld [vmem:[%s1] sm:$0xf]
        %v261 = vld [vmem:[%s1 + $0x4] sm:$0xf]
        %v262 = vld [vmem:[%s1 + $0x8] sm:$0xf]
        %v263 = vld [vmem:[%s1 + $0xc] sm:$0xf]
        %v264 = vld [vmem:[%s1 + $0x10] sm:$0xf]
        %v265 = vld [vmem:[%s1 + $0x14] sm:$0xf]
        %v266 = vld [vmem:[%s1 + $0x18] sm:$0xf]
        %v267 = vld [vmem:[%s1 + $0x1c] sm:$0xf]
        %v268 = vld [vmem:[%s1 + $0x20] sm:$0xf]
        %v269 = vld [vmem:[%s1 + $0x24] sm:$0xf]
        %v270 = vld [vmem:[%s1 + $0x28] sm:$0xf]
        %v271 = vld [vmem:[%s1 + $0x2c] sm:$0xf]
        %v272 = vld [vmem:[%s1 + $0x30] sm:$0xf]
        %v273 = vld [vmem:[%s1 + $0x34] sm:$0xf]
        %v274 = vld [vmem:[%s1 + $0x38] sm:$0xf]
        %v275 = vld [vmem:[%s1 + $0x3c] sm:$0xf]
        %v292 = vunpack.c.l.b16 %v260
        %v293 = vunpack.c.l.b16 %v261
        %v294 = vunpack.c.l.b16 %v262
        %v295 = vunpack.c.l.b16 %v263
        %v296 = vunpack.c.l.b16 %v264
        %v297 = vunpack.c.l.b16 %v265
        %v298 = vunpack.c.l.b16 %v266
        %v299 = vunpack.c.l.b16 %v267
        %v300 = vunpack.c.l.b16 %v268
        %v301 = vunpack.c.l.b16 %v269
        %v302 = vunpack.c.l.b16 %v270
        %v303 = vunpack.c.l.b16 %v271
        %v304 = vunpack.c.l.b16 %v272
        %v305 = vunpack.c.l.b16 %v273
        %v306 = vunpack.c.l.b16 %v274
        %v307 = vunpack.c.l.b16 %v275
        %v308 = vpack.c.b16 %v293, %v292
        %v309 = vpack.c.b16 %v295, %v294
        %v310 = vpack.c.b16 %v297, %v296
        %v311 = vpack.c.b16 %v299, %v298
        %v312 = vpack.c.b16 %v301, %v300
        %v313 = vpack.c.b16 %v303, %v302
        %v314 = vpack.c.b16 %v305, %v304
        %v315 = vpack.c.b16 %v307, %v306
        %324 = vmatpush.bf16.msra.mxu0 %v315
        %325 = vmatpush.bf16.msra.mxu0 %v314
        %326 = vmatpush.bf16.msra.mxu0 %v313
        %327 = vmatpush.bf16.msra.mxu0 %v312
        %328 = vmatpush.bf16.msra.mxu0 %v311
        %329 = vmatpush.bf16.msra.mxu0 %v310
        %330 = vmatpush.bf16.msra.mxu0 %v309
        %331 = vmatpush.bf16.msra.mxu0 %v308
        %332 = vmatmul.bf16.gmra.mxu0 %v256
        %v333 = vpop.f32.mrf.mxu0
        %v334 = vadd.f32 0.0, %v333
        %v335 = vpop.f32.mrf.mxu0
        %v336 = vadd.f32 0.0, %v335
        %337 = vmatmul.bf16.gmra.mxu0 %v257
        %v338 = vpop.f32.mrf.mxu0
        %v339 = vadd.f32 0.0, %v338
        %v340 = vpop.f32.mrf.mxu0
        %v341 = vadd.f32 0.0, %v340
        %342 = vmatmul.bf16.gmra.mxu0 %v258
        %v343 = vpop.f32.mrf.mxu0
        %v344 = vadd.f32 0.0, %v343
        %v345 = vpop.f32.mrf.mxu0
        %v346 = vadd.f32 0.0, %v345
        %347 = vmatmul.bf16.gmra.mxu0 %v259
        %v348 = vpop.f32.mrf.mxu0
        %v349 = vadd.f32 0.0, %v348
        %v350 = vpop.f32.mrf.mxu0
        %v351 = vadd.f32 0.0, %v350
        %352 = vdwg.mxu0
        %v353 = vpack.c.bf16 %v336, %v334
        %v354 = vpack.c.bf16 %v341, %v339
        %v355 = vpack.c.bf16 %v346, %v344
        %v356 = vpack.c.bf16 %v351, %v349
        %v357 = vld [vmem:[%s2] sm:$0xf]
        %v358 = vld [vmem:[%s2 + $0x4] sm:$0xf]
        %v359 = vld [vmem:[%s2 + $0x8] sm:$0xf]
        %v360 = vld [vmem:[%s2 + $0xc] sm:$0xf]
        %v361 = vld [vmem:[%s2 + $0x10] sm:$0xf]
        %v362 = vld [vmem:[%s2 + $0x14] sm:$0xf]
        %v363 = vld [vmem:[%s2 + $0x18] sm:$0xf]
        %v364 = vld [vmem:[%s2 + $0x1c] sm:$0xf]
        %v365 = vld [vmem:[%s2 + $0x20] sm:$0xf]
        %v366 = vld [vmem:[%s2 + $0x24] sm:$0xf]
        %v367 = vld [vmem:[%s2 + $0x28] sm:$0xf]
        %v368 = vld [vmem:[%s2 + $0x2c] sm:$0xf]
        %v369 = vld [vmem:[%s2 + $0x30] sm:$0xf]
        %v370 = vld [vmem:[%s2 + $0x34] sm:$0xf]
        %v371 = vld [vmem:[%s2 + $0x38] sm:$0xf]
        %v372 = vld [vmem:[%s2 + $0x3c] sm:$0xf]
        %v373 = vld [vmem:[%s3] sm:$0x1]
        %v375 = vperm.slane %v373, 0
        %v393 = vunpack.c.l.b16 %v357
        %v394 = vunpack.c.l.b16 %v358
        %v395 = vunpack.c.l.b16 %v359
        %v396 = vunpack.c.l.b16 %v360
        %v397 = vunpack.c.l.b16 %v361
        %v398 = vunpack.c.l.b16 %v362
        %v399 = vunpack.c.l.b16 %v363
        %v400 = vunpack.c.l.b16 %v364
        %v401 = vunpack.c.l.b16 %v365
        %v402 = vunpack.c.l.b16 %v366
        %v403 = vunpack.c.l.b16 %v367
        %v404 = vunpack.c.l.b16 %v368
        %v405 = vunpack.c.l.b16 %v369
        %v406 = vunpack.c.l.b16 %v370
        %v407 = vunpack.c.l.b16 %v371
        %v408 = vunpack.c.l.b16 %v372
        %v409 = vpack.c.b16 %v394, %v393
        %v410 = vpack.c.b16 %v396, %v395
        %v411 = vpack.c.b16 %v398, %v397
        %v412 = vpack.c.b16 %v400, %v399
        %v413 = vpack.c.b16 %v402, %v401
        %v414 = vpack.c.b16 %v404, %v403
        %v415 = vpack.c.b16 %v406, %v405
        %v416 = vpack.c.b16 %v408, %v407
        %425 = vmatpush.bf16.msra.mxu0 %v416
        %426 = vmatpush.bf16.msra.mxu0 %v415
        %427 = vmatpush.bf16.msra.mxu0 %v414
        %428 = vmatpush.bf16.msra.mxu0 %v413
        %429 = vmatpush.bf16.msra.mxu0 %v412
        %430 = vmatpush.bf16.msra.mxu0 %v411
        %431 = vmatpush.bf16.msra.mxu0 %v410
        %432 = vmatpush.bf16.msra.mxu0 %v409
        %433 = vmatmul.bf16.gmra.mxu0 %v353
        %v434 = vpop.f32.mrf.mxu0
        %v435 = vadd.f32 %v375, %v434
        %v436 = vpop.f32.mrf.mxu0
        %v437 = vadd.f32 %v375, %v436
        %438 = vmatmul.bf16.gmra.mxu0 %v354
        %v439 = vpop.f32.mrf.mxu0
        %v440 = vadd.f32 %v375, %v439
        %v441 = vpop.f32.mrf.mxu0
        %v442 = vadd.f32 %v375, %v441
        %443 = vmatmul.bf16.gmra.mxu0 %v355
        %v444 = vpop.f32.mrf.mxu0
        %v445 = vadd.f32 %v375, %v444
        %v446 = vpop.f32.mrf.mxu0
        %v447 = vadd.f32 %v375, %v446
        %448 = vmatmul.bf16.gmra.mxu0 %v356
        %v449 = vpop.f32.mrf.mxu0
        %v450 = vadd.f32 %v375, %v449
        %v451 = vpop.f32.mrf.mxu0
        %v452 = vadd.f32 %v375, %v451
        %453 = vdwg.mxu0
        %v454 = vtanh.pop %v435
        %v455 = vtanh.pop %v437
        %v456 = vtanh.pop %v440
        %v457 = vtanh.pop %v442
        %v458 = vtanh.pop %v445
        %v459 = vtanh.pop %v447
        %v460 = vtanh.pop %v450
        %v461 = vtanh.pop %v452
        %v462 = vrot.slane %v454, 4
        %v463 = vadd.f32 %v454, %v462
        %v464 = vrot.slane %v463, 2
        %v465 = vadd.f32 %v463, %v464
        %v466 = vrot.slane %v465, 1
        %v467 = vadd.f32 %v465, %v466
        %v468 = vrot.slane %v455, 4
        %v469 = vadd.f32 %v455, %v468
        %v470 = vrot.slane %v469, 2
        %v471 = vadd.f32 %v469, %v470
        %v472 = vrot.slane %v471, 1
        %v473 = vadd.f32 %v471, %v472
        %v474 = vrot.slane %v456, 4
        %v475 = vadd.f32 %v456, %v474
        %v476 = vrot.slane %v475, 2
        %v477 = vadd.f32 %v475, %v476
        %v478 = vrot.slane %v477, 1
        %v479 = vadd.f32 %v477, %v478
        %v480 = vrot.slane %v457, 4
        %v481 = vadd.f32 %v457, %v480
        %v482 = vrot.slane %v481, 2
        %v483 = vadd.f32 %v481, %v482
        %v484 = vrot.slane %v483, 1
        %v485 = vadd.f32 %v483, %v484
        %v486 = vrot.slane %v458, 4
        %v487 = vadd.f32 %v458, %v486
        %v488 = vrot.slane %v487, 2
        %v489 = vadd.f32 %v487, %v488
        %v490 = vrot.slane %v489, 1
        %v491 = vadd.f32 %v489, %v490
        %v492 = vrot.slane %v459, 4
        %v493 = vadd.f32 %v459, %v492
        %v494 = vrot.slane %v493, 2
        %v495 = vadd.f32 %v493, %v494
        %v496 = vrot.slane %v495, 1
        %v497 = vadd.f32 %v495, %v496
        %v498 = vrot.slane %v460, 4
        %v499 = vadd.f32 %v460, %v498
        %v500 = vrot.slane %v499, 2
        %v501 = vadd.f32 %v499, %v500
        %v502 = vrot.slane %v501, 1
        %v503 = vadd.f32 %v501, %v502
        %v504 = vrot.slane %v461, 4
        %v505 = vadd.f32 %v461, %v504
        %v506 = vrot.slane %v505, 2
        %v507 = vadd.f32 %v505, %v506
        %v508 = vrot.slane %v507, 1
        %v509 = vadd.f32 %v507, %v508
        %vm518 = vcmask 1041409
        %v519 = vsel %vm518, %v473, %v467
        %vm520 = vcmask 1042434
        %v521 = vsel %vm520, %v479, %v519
        %vm522 = vcmask 1043459
        %v523 = vsel %vm522, %v485, %v521
        %vm524 = vcmask 1044484
        %v525 = vsel %vm524, %v491, %v523
        %vm526 = vcmask 1045509
        %v527 = vsel %vm526, %v497, %v525
        %vm528 = vcmask 1046534
        %v529 = vsel %vm528, %v503, %v527
        %vm530 = vcmask 1047559
        %v531 = vsel %vm530, %v509, %v529
        %533 = vst [vmem:[%s191] sm:$0xff] %v531
        %s534 = sand.u32 %s115, 1
        %s535 = scalar_lea.sflag [#allocation3], %s534
        %s536 = sand.u32 %s115, 1
        %s537 = smul.addr %s536, 8
        %s538 = scalar_lea.vmem [#allocation2], %s537
        // Predicated region
        $region37: #{tpu_custom_call.1} parent=35 // pred_check
          %p539 = pneg %p125
        $region38: #{tpu_custom_call.1} parent=35 // pred_check_branch
          %541 = sbr.rel (%p539) target = $region40
        $region39: #{tpu_custom_call.1} parent=35 // pred_region
          %543 = vsyncadd %s535, 0
          %s544 = smul.addr %s18, 8
          %s545 = scalar_lea.hbm %s4, %s544
          %s547 = sshll.u32 %s538, 4
          %s548 = int_to_ptr.vmem [resolvable:$true] %s547
          %s549 = sshll.u32 %s545, 4
          %s550 = int_to_ptr.hbm [resolvable:$true] %s549
          %552 = dma.vmem_to_hbm [thread:$0]  %s548, 128, %s550, %s535
        $region40: #{tpu_custom_call.1} parent=35 // pred_fallthru
          _
      $region36: #{tpu_custom_call.1} parent=5 // pred_fallthru
        _
      %p553 = scmp.le.s32.totalorder 2, %s13
      // Predicated region
      $region41: #{tpu_custom_call.1} parent=5 // pred_check
        %p554 = pneg %p553
      $region42: #{tpu_custom_call.1} parent=5 // pred_check_branch
        %556 = sbr.rel (%p554) target = $region44
      $region43: #{tpu_custom_call.1} parent=5 // pred_region
        %s557 = ssub.s32 %s13, 2
        // Predicated region
        $region45: #{tpu_custom_call.1} parent=43 // pred_check
          %p558 = pneg %p131
        $region46: #{tpu_custom_call.1} parent=43 // pred_check_branch
          %560 = sbr.rel (%p558) target = $region48
        $region47: #{tpu_custom_call.1} parent=43 // pred_region
          %s561 = sand.u32 %s116, 1
          %s562 = scalar_lea.sflag [#allocation3], %s561
          %s563 = sand.u32 %s116, 1
          %s564 = smul.addr %s563, 8
          %s565 = scalar_lea.vmem [#allocation2], %s564
          %567 = dma.done %s562, 128
        $region48: #{tpu_custom_call.1} parent=43 // pred_fallthru
          _
      $region44: #{tpu_custom_call.1} parent=5 // pred_fallthru
        _
    $region6: #{tpu_custom_call.1} parent=1 // loop_footer
      %s17 = sadd.s32 1, %s13
    $region7: #{tpu_custom_call.1} parent=1 // loop_footer_branch
      %12 = sbr.rel target = $region3
    $region8: #{tpu_custom_call.1} parent=1 // loop_exit
      _
    %568 = vsyncpa [#allocation3], 1
    %s569 = scalar_lea.sflag [#allocation3], 1
    %570 = vsyncpa %s569, 1

</llo_original>
